<compile_context>
chip_gen: v7x
topology: tpu7x:2x2x1
jax: 0.10.0
libtpu: 0.0.40
codegen_flags: <defaults>
</compile_context>

<pallas_src>
import functools

import jax
import jax.numpy as jnp
from jax.experimental import pallas as pl
from jax.experimental.pallas import tpu as pltpu


# ---------------------------------------------------------------------------
# Pallas kernel: one fused GEMM + gate math per batch block.
# ---------------------------------------------------------------------------
def rowlstm_kernel(x_ref, h_ref, c_ref, w_ref, b_ref, h_out_ref, c_out_ref,
                   *, nunits, cx, split_k):
    """x_ref:(bb, C*W) bf16   h_ref:(bb, H*W) bf16   c_ref:(bb, H*W) f32
    w_ref:(2*C*W, 4*H*W) bf16   b_ref:(1, 4*H*W) f32 (pre-summed conv biases).
    """
    x = x_ref[...]          # bf16, no in-kernel cast
    h = h_ref[...]          # bf16, no in-kernel cast

    if split_k:
        # v5e: MXU is 128 deep — two K=128 accumulating dots against free
        # tile-aligned views of the stacked weight (no concat buffer).
        gates = jnp.dot(x, w_ref[pl.ds(0, cx), :],
                        preferred_element_type=jnp.float32)
        gates = gates + jnp.dot(h, w_ref[pl.ds(cx, h.shape[1]), :],
                                preferred_element_type=jnp.float32)
    else:
        # v6e/v7x: one full-depth K=256 push train per N-tile.
        xh = jnp.concatenate([x, h], axis=1)
        gates = jnp.dot(xh, w_ref[...], preferred_element_type=jnp.float32)

    gates = gates + b_ref[...]

    # NOTE: the reference module applies sigmoid to ALL four gates (incl. g).
    # Single EUP op per gate — keep as-is (do not expand into exp + divide).
    lstm = jax.nn.sigmoid(gates)
    i_g = lstm[:, 0 * nunits:1 * nunits]
    g_g = lstm[:, 1 * nunits:2 * nunits]
    f_g = lstm[:, 2 * nunits:3 * nunits]
    o_g = lstm[:, 3 * nunits:4 * nunits]

    c_new = f_g * c_ref[...] + i_g * g_g          # cell state strictly f32
    c_out_ref[...] = c_new
    h_out_ref[...] = (o_g * jnp.tanh(c_new)).astype(h_out_ref.dtype)


def _is_v5e():
    try:
        kind = jax.devices()[0].device_kind.lower()
        return ("v5e" in kind) or ("v5 lite" in kind) or ("v5litepod" in kind)
    except Exception:  # pragma: no cover - conservative default
        return False


def _pick_batch_block(batch):
    """Fixed, aligned batch block: >=2 blocks when batch >= 16 (v7x megacore),
    bf16-pack (16-row) aligned, capped at 256 rows to bound the f32 gate
    intermediates' VMEM footprint."""
    if batch <= 8:
        return batch
    bb = -(-batch // 2)                 # at least two grid steps
    bb = ((bb + 15) // 16) * 16         # bf16 sublane-pack aligned
    return min(bb, 256)


def rowlstm_pallas(x, h, c, w_stack, bias, *, nunits):
    batch = x.shape[0]
    cx, ch = x.shape[1], h.shape[1]
    k_in = w_stack.shape[0]
    assert cx + ch == k_in, "stacked weight does not match input/state widths"
    assert nunits % 128 == 0, (
        "num_units must be a multiple of 128 so gate slices stay lane-aligned")

    split_k = _is_v5e() and (cx % 16 == 0)

    bb = _pick_batch_block(batch)
    padded = -(-batch // bb) * bb
    if padded != batch:                 # pad to a whole number of blocks
        pad = padded - batch
        x = jnp.pad(x, ((0, pad), (0, 0)))
        h = jnp.pad(h, ((0, pad), (0, 0)))
        c = jnp.pad(c, ((0, pad), (0, 0)))
    grid = (padded // bb,)

    kernel = functools.partial(rowlstm_kernel, nunits=nunits, cx=cx,
                               split_k=split_k)

    h_out, c_out = pl.pallas_call(
        kernel,
        out_shape=(jax.ShapeDtypeStruct((padded, nunits), jnp.bfloat16),
                   jax.ShapeDtypeStruct((padded, nunits), jnp.float32)),
        grid=grid,
        in_specs=[
            pl.BlockSpec((bb, cx), lambda i: (i, 0)),            # x (bf16)
            pl.BlockSpec((bb, ch), lambda i: (i, 0)),            # h_prev (bf16)
            pl.BlockSpec((bb, nunits), lambda i: (i, 0)),        # c_prev (f32)
            pl.BlockSpec((k_in, 4 * nunits), lambda i: (0, 0)),  # stacked weight
            pl.BlockSpec((1, 4 * nunits), lambda i: (0, 0)),     # summed bias
        ],
        out_specs=(pl.BlockSpec((bb, nunits), lambda i: (i, 0)),
                   pl.BlockSpec((bb, nunits), lambda i: (i, 0))),
        compiler_params=pltpu.CompilerParams(
            dimension_semantics=("parallel",)),  # batch blocks are independent
    )(x, h, c, w_stack, bias)

    if padded != batch:
        h_out = h_out[:batch]
        c_out = c_out[:batch]
    return h_out, c_out


# ---------------------------------------------------------------------------
# Parameter preprocessing (done once, outside the hot path).
# ---------------------------------------------------------------------------
def conv1d_to_dense(weight, width):
    """(Cout, Cin, 3) conv (padding=1) -> dense (Cin*W, Cout*W) banded matrix."""
    c_out, c_in, k = weight.shape
    pos_out = jnp.arange(width)
    pos_in = jnp.arange(width)
    tap = pos_in[None, :] - pos_out[:, None] + 1          # (Wo, Wi); padding=1
    valid = (tap >= 0) & (tap < k)
    gathered = weight[:, :, jnp.clip(tap, 0, k - 1)]      # (Cout, Cin, Wo, Wi)
    band = jnp.where(valid[None, None], gathered, 0.0)
    # band[co, ci, wo, wi] -> dense[ci*W + wi, co*W + wo]
    return jnp.transpose(band, (1, 3, 0, 2)).reshape(c_in * width, c_out * width)


def prepare_params(params, *, image_size):
    """Build the stacked bf16 GEMM weight and the pre-summed flattened bias."""
    w_is_masked, b_is, w_ss, b_ss = params
    big_wi = conv1d_to_dense(w_is_masked, image_size)   # acts on `inputs`
    big_ws = conv1d_to_dense(w_ss, image_size)          # acts on `h_prev`
    w_stack = jnp.concatenate([big_wi, big_ws], axis=0).astype(jnp.bfloat16)
    # Scaling limit of the dense banded formulation: the weight must stay
    # VMEM-resident (16*C*H*W^2 bytes); v7x default scoped VMEM is half of
    # v5e/v6e, so guard conservatively.
    assert w_stack.size * 2 <= 24 * 1024 * 1024, (
        "dense block-banded weight too large to keep VMEM-resident; "
        "switch to per-tap K-stacked weights or N-block the gate axis")
    # TODO(synk): for very large 4*H*W, add a second grid axis over N-tiles of
    # the weight so it streams instead of living whole in VMEM.
    bias = jnp.repeat(b_is + b_ss, image_size).reshape(1, -1).astype(jnp.float32)
    return w_stack, bias


def row_lstm_forward(inputs, states, prepared, *, hidden_dim, image_size):
    """Matches RowLSTMLayer.forward: returns (h, (c, h)), each (B, num_units).
    x / h_prev are cast to bf16 once here; c stays f32; h is returned bf16
    (carry it in bf16 across rows)."""
    c_prev, h_prev = states
    w_stack, bias = prepared
    nunits = hidden_dim * image_size
    h_new, c_new = rowlstm_pallas(
        inputs.astype(jnp.bfloat16), h_prev.astype(jnp.bfloat16),
        c_prev.astype(jnp.float32), w_stack, bias, nunits=nunits)
    # Already in the PyTorch flattened channel-major layout — no transposes.
    return h_new, (c_new, h_new)


# ---------------------------------------------------------------------------
# Pure-JAX reproduction of the PyTorch forward (f32 ground truth).
# ---------------------------------------------------------------------------
def reference_forward(inputs, states, params, *, in_channels, hidden_dim,
                      image_size):
    c_prev, h_prev = states
    w_is_masked, b_is, w_ss, b_ss = params
    B = inputs.shape[0]
    x = inputs.reshape(B, in_channels, image_size)
    h = h_prev.reshape(B, hidden_dim, image_size)

    def conv1d(z, w, b):
        out = jax.lax.conv_general_dilated(
            z, w, window_strides=(1,), padding=[(1, 1)],
            dimension_numbers=("NCH", "OIH", "NCH"),
            precision=jax.lax.Precision.HIGHEST)
        return out + b[None, :, None]

    s_s = conv1d(h, w_ss, b_ss).reshape(B, -1)
    i_s = conv1d(x, w_is_masked, b_is).reshape(B, -1)
    lstm = jax.nn.sigmoid(s_s + i_s)
    i_g, g_g, f_g, o_g = jnp.split(lstm, 4, axis=1)
    c = f_g * c_prev + i_g * g_g
    hh = o_g * jnp.tanh(c)
    return hh, (c, hh)


if __name__ == "__main__":
    # The reference module only type-checks when in_channels == hidden_dim
    # (conv_i_s expects hidden_dim input channels but is applied to `inputs`).
    in_channels = 8
    hidden_dim = 8
    image_size = 16
    batch = 2
    num_units = hidden_dim * image_size
    assert in_channels == hidden_dim

    key = jax.random.PRNGKey(0)
    ks = jax.random.split(key, 7)

    # Deterministic parameter init (torch conv layout: (Cout, Cin, K)).
    w_is = 0.1 * jax.random.normal(ks[0], (4 * hidden_dim, hidden_dim, 3),
                                   jnp.float32)
    # MaskedConv1d type 'B', kernel_size=3: zero positions right of center.
    mask = jnp.ones((4 * hidden_dim, hidden_dim, 3), jnp.float32)
    mask = mask.at[:, :, 2:].set(0.0)
    w_is_masked = w_is * mask
    b_is = 0.1 * jax.random.normal(ks[1], (4 * hidden_dim,), jnp.float32)
    w_ss = 0.1 * jax.random.normal(ks[2], (4 * hidden_dim, in_channels, 3),
                                   jnp.float32)
    b_ss = 0.1 * jax.random.normal(ks[3], (4 * hidden_dim,), jnp.float32)
    params = (w_is_masked, b_is, w_ss, b_ss)

    # Inputs / states in the PyTorch flattened layout (B, C*W).
    inputs = jax.random.normal(ks[4], (batch, in_channels * image_size),
                               jnp.float32)
    c_prev = jax.random.normal(ks[5], (batch, num_units), jnp.float32)
    h_prev = jax.random.normal(ks[6], (batch, num_units), jnp.float32)
    states = (c_prev, h_prev)

    # One-time weight prep (cached across the PixelRNN row scan in real use).
    prepared = prepare_params(params, image_size=image_size)

    h, (c_new, h_new) = row_lstm_forward(
        inputs, states, prepared, hidden_dim=hidden_dim,
        image_size=image_size)
    jax.block_until_ready((h, c_new, h_new))

    h_exp, (c_exp, _) = reference_forward(
        inputs, states, params, in_channels=in_channels,
        hidden_dim=hidden_dim, image_size=image_size)

    # bf16 MXU operands + bf16 h output => compare at bf16-level tolerance.
    assert jnp.allclose(h.astype(jnp.float32), h_exp, atol=5e-2, rtol=5e-2)
    assert jnp.allclose(c_new, c_exp, atol=5e-2, rtol=5e-2)
    print("KERNEL_OK")
</pallas_src>

<mosaic_0001>
module attributes {stable_mosaic.version = 11 : i64} {
  func.func @rowlstm_kernel(%arg0: i32, %arg1: memref<2x128xbf16, #tpu.memory_space<vmem>>, %arg2: memref<2x128xbf16, #tpu.memory_space<vmem>>, %arg3: memref<2x128xf32, #tpu.memory_space<vmem>>, %arg4: memref<256x512xbf16, #tpu.memory_space<vmem>>, %arg5: memref<1x512xf32, #tpu.memory_space<vmem>>, %arg6: memref<2x128xbf16, #tpu.memory_space<vmem>>, %arg7: memref<2x128xf32, #tpu.memory_space<vmem>>) attributes {dimension_semantics = [#tpu.dimension_semantics<parallel>], iteration_bounds = array<i64: 1>, scalar_prefetch = 0 : i64, scratch_operands = 0 : i64, tpu.core_type = #tpu.core_type<tc>, window_params = [{transform_indices = @transform_0, window_bounds = array<i64: 2, 128>}, {transform_indices = @transform_1, window_bounds = array<i64: 2, 128>}, {transform_indices = @transform_2, window_bounds = array<i64: 2, 128>}, {pipeline_mode = #tpu.pipeline_mode<synchronous>, transform_indices = @transform_3, window_bounds = array<i64: 256, 512>}, {pipeline_mode = #tpu.pipeline_mode<synchronous>, transform_indices = @transform_4, window_bounds = array<i64: 1, 512>}, {transform_indices = @transform_5, window_bounds = array<i64: 2, 128>}, {transform_indices = @transform_6, window_bounds = array<i64: 2, 128>}]} {
    %c0 = arith.constant 0 : index
    %c0_0 = arith.constant 0 : index
    %0 = vector.load %arg1[%c0, %c0_0] : memref<2x128xbf16, #tpu.memory_space<vmem>>, vector<2x128xbf16>
    %c0_1 = arith.constant 0 : index
    %c0_2 = arith.constant 0 : index
    %1 = vector.load %arg2[%c0_1, %c0_2] : memref<2x128xbf16, #tpu.memory_space<vmem>>, vector<2x128xbf16>
    %2 = tpu.concatenate %0, %1 in 1 : vector<2x128xbf16>, vector<2x128xbf16> -> vector<2x256xbf16>
    %c0_3 = arith.constant 0 : index
    %c0_4 = arith.constant 0 : index
    %3 = vector.load %arg4[%c0_3, %c0_4] : memref<256x512xbf16, #tpu.memory_space<vmem>>, vector<256x512xbf16>
    %cst = arith.constant dense<0.000000e+00> : vector<2x512xf32>
    %4 = tpu.matmul %2, %3, %cst {dimension_numbers = #tpu.dot_dimension_numbers<[1], [0], [0], [1], [0, 0, 1, 1], [], []>} : vector<2x256xbf16>, vector<256x512xbf16>, vector<2x512xf32> -> vector<2x512xf32>
    %c0_5 = arith.constant 0 : index
    %c0_6 = arith.constant 0 : index
    %5 = vector.load %arg5[%c0_5, %c0_6] : memref<1x512xf32, #tpu.memory_space<vmem>>, vector<1x512xf32>
    %6 = vector.broadcast %5 : vector<1x512xf32> to vector<2x512xf32>
    %7 = arith.addf %4, %6 : vector<2x512xf32>
    %8 = arith.negf %7 : vector<2x512xf32>
    %9 = math.exp %8 : vector<2x512xf32>
    %cst_7 = arith.constant 1.000000e+00 : f32
    %10 = vector.broadcast %cst_7 : f32 to vector<2x512xf32>
    %11 = arith.addf %10, %9 : vector<2x512xf32>
    %12 = arith.divf %10, %11 : vector<2x512xf32>
    %13 = vector.extract_strided_slice %12 {offsets = [0, 0], sizes = [2, 128], strides = [1, 1]} : vector<2x512xf32> to vector<2x128xf32>
    %14 = vector.extract_strided_slice %12 {offsets = [0, 128], sizes = [2, 128], strides = [1, 1]} : vector<2x512xf32> to vector<2x128xf32>
    %15 = vector.extract_strided_slice %12 {offsets = [0, 256], sizes = [2, 128], strides = [1, 1]} : vector<2x512xf32> to vector<2x128xf32>
    %16 = vector.extract_strided_slice %12 {offsets = [0, 384], sizes = [2, 128], strides = [1, 1]} : vector<2x512xf32> to vector<2x128xf32>
    %c0_8 = arith.constant 0 : index
    %c0_9 = arith.constant 0 : index
    %17 = vector.load %arg3[%c0_8, %c0_9] : memref<2x128xf32, #tpu.memory_space<vmem>>, vector<2x128xf32>
    %18 = arith.mulf %15, %17 : vector<2x128xf32>
    %19 = arith.mulf %13, %14 : vector<2x128xf32>
    %20 = arith.addf %18, %19 : vector<2x128xf32>
    %c0_10 = arith.constant 0 : index
    %c0_11 = arith.constant 0 : index
    %21 = vector.load %arg7[%c0_10, %c0_11] : memref<2x128xf32, #tpu.memory_space<vmem>>, vector<2x128xf32>
    tpu.vector_store %arg7[%c0_10, %c0_11], %20 {strides = array<i32>} : memref<2x128xf32, #tpu.memory_space<vmem>>, vector<2x128xf32>,
    %22 = math.tanh %20 : vector<2x128xf32>
    %23 = arith.mulf %16, %22 : vector<2x128xf32>
    %24 = arith.truncf %23 : vector<2x128xf32> to vector<2x128xbf16>
    %c0_12 = arith.constant 0 : index
    %c0_13 = arith.constant 0 : index
    %25 = vector.load %arg6[%c0_12, %c0_13] : memref<2x128xbf16, #tpu.memory_space<vmem>>, vector<2x128xbf16>
    tpu.vector_store %arg6[%c0_12, %c0_13], %24 {strides = array<i32>} : memref<2x128xbf16, #tpu.memory_space<vmem>>, vector<2x128xbf16>,
    return
  }
  func.func @transform_0(%arg0: i32) -> (i32, i32) {
    %c0_i32 = arith.constant 0 : i32
    %c0_i32_0 = arith.constant 0 : i32
    return %arg0, %c0_i32 : i32, i32
  }
  func.func @transform_1(%arg0: i32) -> (i32, i32) {
    %c0_i32 = arith.constant 0 : i32
    %c0_i32_0 = arith.constant 0 : i32
    return %arg0, %c0_i32 : i32, i32
  }
  func.func @transform_2(%arg0: i32) -> (i32, i32) {
    %c0_i32 = arith.constant 0 : i32
    %c0_i32_0 = arith.constant 0 : i32
    return %arg0, %c0_i32 : i32, i32
  }
  func.func @transform_3(%arg0: i32) -> (i32, i32) {
    %c0_i32 = arith.constant 0 : i32
    %c0_i32_0 = arith.constant 0 : i32
    %c0_i32_1 = arith.constant 0 : i32
    return %c0_i32, %c0_i32_0 : i32, i32
  }
  func.func @transform_4(%arg0: i32) -> (i32, i32) {
    %c0_i32 = arith.constant 0 : i32
    %c0_i32_0 = arith.constant 0 : i32
    %c0_i32_1 = arith.constant 0 : i32
    return %c0_i32, %c0_i32_0 : i32, i32
  }
  func.func @transform_5(%arg0: i32) -> (i32, i32) {
    %c0_i32 = arith.constant 0 : i32
    %c0_i32_0 = arith.constant 0 : i32
    return %arg0, %c0_i32 : i32, i32
  }
  func.func @transform_6(%arg0: i32) -> (i32, i32) {
    %c0_i32 = arith.constant 0 : i32
    %c0_i32_0 = arith.constant 0 : i32
    return %arg0, %c0_i32 : i32, i32
  }
}

</mosaic_0001>

<llo_original>
// kernel: tpu_custom_call.1
$region0: #{tpu_custom_call.1}
  #allocation0 [shape = 'u32[]', space=smem, size = 0x4, offset = 0x4, fixed_abs, tag = 'smem constant byte address 0x4 - core index']
  #allocation1 [shape = 'u32[144,128]{1,0:T(1,128)}', space=vmem, size = 0x12000, scoped, tag = 'internal scratch']
  %s0 = inlined_call_operand.hbm [shape: bf16[2,128], index: 0, kind: input, shape index: {}]
  %s1 = inlined_call_operand.vmem [shape: bf16[2,128], index: 1, kind: input, shape index: {}]
  %s2 = inlined_call_operand.vmem [shape: f32[2,128], index: 2, kind: input, shape index: {}]
  %s3 = inlined_call_operand.hbm [shape: bf16[256,512], index: 3, kind: input, shape index: {}]
  %s4 = inlined_call_operand.vmem [shape: f32[1,512], index: 4, kind: input, shape index: {}]
  %s5 = inlined_call_operand.hbm [shape: bf16[2,128], index: 5, kind: output, shape index: {0}]
  %s6 = inlined_call_operand.hbm [shape: f32[2,128], index: 6, kind: output, shape index: {1}]
  %7 = xla_tuple %s5, %s6
  %s8 = sld [smem:[#allocation0]]
  $region46: #{tpu_custom_call.1} parent=0
    _
  %s10 = ssub.s32 1, %s8
  %s11 = scalar_select 0, %s10, %s8
  $region1: #{tpu_custom_call.1} parent=0
    #allocation2 [shape = 'u8[512]{0}', space=vmem, size = 0x400, scoped, tag = 'input window, operand 0, single buffered']
    #allocation3 [shape = 's32[1]{0}', space=sflag, size = 0x4, scoped, tag = 'scoped memory for tpu_custom_call.1']
    #allocation4 [shape = 's32[1]{0}', space=sflag, size = 0x4, scoped, tag = 'scoped memory for tpu_custom_call.1']
    #allocation5 [shape = 'u8[262144]{0}', space=vmem, size = 0x40000, scoped, tag = 'input window, operand 3, single buffered']
    #allocation6 [shape = 's32[1]{0}', space=sflag, size = 0x4, scoped, tag = 'scoped memory for tpu_custom_call.1']
    #allocation7 [shape = 'u8[512]{0}', space=vmem, size = 0x400, scoped, tag = 'output window, operand 0, single buffered']
    #allocation8 [shape = 'u8[1024]{0}', space=vmem, size = 0x400, scoped, tag = 'output window, operand 1, single buffered']
    #allocation9 [shape = 's32[1]{0}', space=sflag, size = 0x4, scoped, tag = 'scoped memory for tpu_custom_call.1']
    %12 = vsyncpa [#allocation3], 0
    %13 = vsyncpa [#allocation6], 0
    %14 = vsyncpa [#allocation4], 0
    %15 = vsyncpa [#allocation9], 0
    // Predicated region
    $region2: #{tpu_custom_call.1} parent=1 // pred_check
      _
    $region3: #{tpu_custom_call.1} parent=1 // pred_check_branch
      %17 = sbr.rel (0) target = $region5
    $region4: #{tpu_custom_call.1} parent=1 // pred_region
      %s19 = ssub.s32 16, 16
      %20 = vsyncadd [#allocation3], %s19
      %s22 = sshll.u32 [#allocation2], 4
      %s23 = int_to_ptr.vmem [resolvable:$true] %s22
      %25 = dma.hbm_to_vmem [thread:$0]  %s0, 16, %s23, [#allocation3]
    $region5: #{tpu_custom_call.1} parent=1 // pred_fallthru
      _
    // Predicated region
    $region6: #{tpu_custom_call.1} parent=1 // pred_check
      _
    $region7: #{tpu_custom_call.1} parent=1 // pred_check_branch
      %27 = sbr.rel (0) target = $region9
    $region8: #{tpu_custom_call.1} parent=1 // pred_region
      _
    $region9: #{tpu_custom_call.1} parent=1 // pred_fallthru
      _
    // Predicated region
    $region10: #{tpu_custom_call.1} parent=1 // pred_check
      _
    $region11: #{tpu_custom_call.1} parent=1 // pred_check_branch
      %29 = sbr.rel (0) target = $region13
    $region12: #{tpu_custom_call.1} parent=1 // pred_region
      _
    $region13: #{tpu_custom_call.1} parent=1 // pred_fallthru
      _
    // Predicated region
    $region14: #{tpu_custom_call.1} parent=1 // pred_check
      _
    $region15: #{tpu_custom_call.1} parent=1 // pred_check_branch
      %31 = sbr.rel (0) target = $region17
    $region16: #{tpu_custom_call.1} parent=1 // pred_region
      %s33 = ssub.s32 8192, 8192
      %34 = vsyncadd [#allocation6], %s33
      %s35 = sshll.u32 [#allocation5], 4
      %s36 = int_to_ptr.vmem [resolvable:$true] %s35
      %41 = dma.hbm_to_vmem [thread:$0]  %s3, 8192, %s36, [#allocation6], 256, 256, 16
    $region17: #{tpu_custom_call.1} parent=1 // pred_fallthru
      _
    // Predicated region
    $region18: #{tpu_custom_call.1} parent=1 // pred_check
      _
    $region19: #{tpu_custom_call.1} parent=1 // pred_check_branch
      %43 = sbr.rel (0) target = $region21
    $region20: #{tpu_custom_call.1} parent=1 // pred_region
      _
    $region21: #{tpu_custom_call.1} parent=1 // pred_fallthru
      _
    // Predicated region
    $region22: #{tpu_custom_call.1} parent=1 // pred_check
      _
    $region23: #{tpu_custom_call.1} parent=1 // pred_check_branch
      %45 = sbr.rel (0) target = $region25
    $region24: #{tpu_custom_call.1} parent=1 // pred_region
      %46 = dma.done [#allocation3], 16
    $region25: #{tpu_custom_call.1} parent=1 // pred_fallthru
      _
    // Predicated region
    $region26: #{tpu_custom_call.1} parent=1 // pred_check
      _
    $region27: #{tpu_custom_call.1} parent=1 // pred_check_branch
      %48 = sbr.rel (0) target = $region29
    $region28: #{tpu_custom_call.1} parent=1 // pred_region
      %49 = dma.done [#allocation6], 8192
    $region29: #{tpu_custom_call.1} parent=1 // pred_fallthru
      _
    %v50 = vld [vmem:[#allocation2] sm:$0x1]
    %v51 = vld [vmem:[%s1] sm:$0x1]
    %v52 = vld [vmem:[#allocation5] sm:$0xff]
    %v53 = vld [vmem:[#allocation5 + $0x8] sm:$0xff]
    %v54 = vld [vmem:[#allocation5 + $0x10] sm:$0xff]
    %v55 = vld [vmem:[#allocation5 + $0x18] sm:$0xff]
    %v56 = vld [vmem:[#allocation5 + $0x20] sm:$0xff]
    %v57 = vld [vmem:[#allocation5 + $0x28] sm:$0xff]
    %v58 = vld [vmem:[#allocation5 + $0x30] sm:$0xff]
    %v59 = vld [vmem:[#allocation5 + $0x38] sm:$0xff]
    %v60 = vld [vmem:[#allocation5 + $0x40] sm:$0xff]
    %v61 = vld [vmem:[#allocation5 + $0x48] sm:$0xff]
    %v62 = vld [vmem:[#allocation5 + $0x50] sm:$0xff]
    %v63 = vld [vmem:[#allocation5 + $0x58] sm:$0xff]
    %v64 = vld [vmem:[#allocation5 + $0x60] sm:$0xff]
    %v65 = vld [vmem:[#allocation5 + $0x68] sm:$0xff]
    %v66 = vld [vmem:[#allocation5 + $0x70] sm:$0xff]
    %v67 = vld [vmem:[#allocation5 + $0x78] sm:$0xff]
    %v68 = vld [vmem:[#allocation5 + $0x80] sm:$0xff]
    %v69 = vld [vmem:[#allocation5 + $0x88] sm:$0xff]
    %v70 = vld [vmem:[#allocation5 + $0x90] sm:$0xff]
    %v71 = vld [vmem:[#allocation5 + $0x98] sm:$0xff]
    %v72 = vld [vmem:[#allocation5 + $0xa0] sm:$0xff]
    %v73 = vld [vmem:[#allocation5 + $0xa8] sm:$0xff]
    %v74 = vld [vmem:[#allocation5 + $0xb0] sm:$0xff]
    %v75 = vld [vmem:[#allocation5 + $0xb8] sm:$0xff]
    %v76 = vld [vmem:[#allocation5 + $0xc0] sm:$0xff]
    %v77 = vld [vmem:[#allocation5 + $0xc8] sm:$0xff]
    %v78 = vld [vmem:[#allocation5 + $0xd0] sm:$0xff]
    %v79 = vld [vmem:[#allocation5 + $0xd8] sm:$0xff]
    %v80 = vld [vmem:[#allocation5 + $0xe0] sm:$0xff]
    %v81 = vld [vmem:[#allocation5 + $0xe8] sm:$0xff]
    %v82 = vld [vmem:[#allocation5 + $0xf0] sm:$0xff]
    %v83 = vld [vmem:[#allocation5 + $0xf8] sm:$0xff]
    %v84 = vld [vmem:[#allocation5 + $0x100] sm:$0xff]
    %v85 = vld [vmem:[#allocation5 + $0x108] sm:$0xff]
    %v86 = vld [vmem:[#allocation5 + $0x110] sm:$0xff]
    %v87 = vld [vmem:[#allocation5 + $0x118] sm:$0xff]
    %v88 = vld [vmem:[#allocation5 + $0x120] sm:$0xff]
    %v89 = vld [vmem:[#allocation5 + $0x128] sm:$0xff]
    %v90 = vld [vmem:[#allocation5 + $0x130] sm:$0xff]
    %v91 = vld [vmem:[#allocation5 + $0x138] sm:$0xff]
    %v92 = vld [vmem:[#allocation5 + $0x140] sm:$0xff]
    %v93 = vld [vmem:[#allocation5 + $0x148] sm:$0xff]
    %v94 = vld [vmem:[#allocation5 + $0x150] sm:$0xff]
    %v95 = vld [vmem:[#allocation5 + $0x158] sm:$0xff]
    %v96 = vld [vmem:[#allocation5 + $0x160] sm:$0xff]
    %v97 = vld [vmem:[#allocation5 + $0x168] sm:$0xff]
    %v98 = vld [vmem:[#allocation5 + $0x170] sm:$0xff]
    %v99 = vld [vmem:[#allocation5 + $0x178] sm:$0xff]
    %v100 = vld [vmem:[#allocation5 + $0x180] sm:$0xff]
    %v101 = vld [vmem:[#allocation5 + $0x188] sm:$0xff]
    %v102 = vld [vmem:[#allocation5 + $0x190] sm:$0xff]
    %v103 = vld [vmem:[#allocation5 + $0x198] sm:$0xff]
    %v104 = vld [vmem:[#allocation5 + $0x1a0] sm:$0xff]
    %v105 = vld [vmem:[#allocation5 + $0x1a8] sm:$0xff]
    %v106 = vld [vmem:[#allocation5 + $0x1b0] sm:$0xff]
    %v107 = vld [vmem:[#allocation5 + $0x1b8] sm:$0xff]
    %v108 = vld [vmem:[#allocation5 + $0x1c0] sm:$0xff]
    %v109 = vld [vmem:[#allocation5 + $0x1c8] sm:$0xff]
    %v110 = vld [vmem:[#allocation5 + $0x1d0] sm:$0xff]
    %v111 = vld [vmem:[#allocation5 + $0x1d8] sm:$0xff]
    %v112 = vld [vmem:[#allocation5 + $0x1e0] sm:$0xff]
    %v113 = vld [vmem:[#allocation5 + $0x1e8] sm:$0xff]
    %v114 = vld [vmem:[#allocation5 + $0x1f0] sm:$0xff]
    %v115 = vld [vmem:[#allocation5 + $0x1f8] sm:$0xff]
    %v116 = vld [vmem:[%s4] sm:$0xf]
    %v118 = vlaneseq
    %v119 = vshrl.u32 %v118, 7
    %v120 = vsub.s32 0, %v119
    %v121 = vrot.slane %v116, %v120
    %v122 = vlaneseq
    %v123 = vshrl.u32 %v122, 7
    %v124 = vsub.s32 1, %v123
    %v125 = vrot.slane %v116, %v124
    %v126 = vlaneseq
    %v127 = vshrl.u32 %v126, 7
    %v128 = vsub.s32 2, %v127
    %v129 = vrot.slane %v116, %v128
    %v130 = vlaneseq
    %v131 = vshrl.u32 %v130, 7
    %v132 = vsub.s32 3, %v131
    %v133 = vrot.slane %v116, %v132
    %v202 = vunpack.c.l.b16 %v52
    %v203 = vunpack.c.h.b16 %v52
    %v204 = vunpack.c.l.b16 %v53
    %v205 = vunpack.c.h.b16 %v53
    %v206 = vunpack.c.l.b16 %v54
    %v207 = vunpack.c.h.b16 %v54
    %v208 = vunpack.c.l.b16 %v55
    %v209 = vunpack.c.h.b16 %v55
    %v210 = vunpack.c.l.b16 %v56
    %v211 = vunpack.c.h.b16 %v56
    %v212 = vunpack.c.l.b16 %v57
    %v213 = vunpack.c.h.b16 %v57
    %v214 = vunpack.c.l.b16 %v58
    %v215 = vunpack.c.h.b16 %v58
    %v216 = vunpack.c.l.b16 %v59
    %v217 = vunpack.c.h.b16 %v59
    %v218 = vunpack.c.l.b16 %v60
    %v219 = vunpack.c.h.b16 %v60
    %v220 = vunpack.c.l.b16 %v61
    %v221 = vunpack.c.h.b16 %v61
    %v222 = vunpack.c.l.b16 %v62
    %v223 = vunpack.c.h.b16 %v62
    %v224 = vunpack.c.l.b16 %v63
    %v225 = vunpack.c.h.b16 %v63
    %v226 = vunpack.c.l.b16 %v64
    %v227 = vunpack.c.h.b16 %v64
    %v228 = vunpack.c.l.b16 %v65
    %v229 = vunpack.c.h.b16 %v65
    %v230 = vunpack.c.l.b16 %v66
    %v231 = vunpack.c.h.b16 %v66
    %v232 = vunpack.c.l.b16 %v67
    %v233 = vunpack.c.h.b16 %v67
    %v234 = vunpack.c.l.b16 %v68
    %v235 = vunpack.c.h.b16 %v68
    %v236 = vunpack.c.l.b16 %v69
    %v237 = vunpack.c.h.b16 %v69
    %v238 = vunpack.c.l.b16 %v70
    %v239 = vunpack.c.h.b16 %v70
    %v240 = vunpack.c.l.b16 %v71
    %v241 = vunpack.c.h.b16 %v71
    %v242 = vunpack.c.l.b16 %v72
    %v243 = vunpack.c.h.b16 %v72
    %v244 = vunpack.c.l.b16 %v73
    %v245 = vunpack.c.h.b16 %v73
    %v246 = vunpack.c.l.b16 %v74
    %v247 = vunpack.c.h.b16 %v74
    %v248 = vunpack.c.l.b16 %v75
    %v249 = vunpack.c.h.b16 %v75
    %v250 = vunpack.c.l.b16 %v76
    %v251 = vunpack.c.h.b16 %v76
    %v252 = vunpack.c.l.b16 %v77
    %v253 = vunpack.c.h.b16 %v77
    %v254 = vunpack.c.l.b16 %v78
    %v255 = vunpack.c.h.b16 %v78
    %v256 = vunpack.c.l.b16 %v79
    %v257 = vunpack.c.h.b16 %v79
    %v258 = vunpack.c.l.b16 %v80
    %v259 = vunpack.c.h.b16 %v80
    %v260 = vunpack.c.l.b16 %v81
    %v261 = vunpack.c.h.b16 %v81
    %v262 = vunpack.c.l.b16 %v82
    %v263 = vunpack.c.h.b16 %v82
    %v264 = vunpack.c.l.b16 %v83
    %v265 = vunpack.c.h.b16 %v83
    %v266 = vunpack.c.l.b16 %v84
    %v267 = vunpack.c.h.b16 %v84
    %v268 = vunpack.c.l.b16 %v85
    %v269 = vunpack.c.h.b16 %v85
    %v270 = vunpack.c.l.b16 %v86
    %v271 = vunpack.c.h.b16 %v86
    %v272 = vunpack.c.l.b16 %v87
    %v273 = vunpack.c.h.b16 %v87
    %v274 = vunpack.c.l.b16 %v88
    %v275 = vunpack.c.h.b16 %v88
    %v276 = vunpack.c.l.b16 %v89
    %v277 = vunpack.c.h.b16 %v89
    %v278 = vunpack.c.l.b16 %v90
    %v279 = vunpack.c.h.b16 %v90
    %v280 = vunpack.c.l.b16 %v91
    %v281 = vunpack.c.h.b16 %v91
    %v282 = vunpack.c.l.b16 %v92
    %v283 = vunpack.c.h.b16 %v92
    %v284 = vunpack.c.l.b16 %v93
    %v285 = vunpack.c.h.b16 %v93
    %v286 = vunpack.c.l.b16 %v94
    %v287 = vunpack.c.h.b16 %v94
    %v288 = vunpack.c.l.b16 %v95
    %v289 = vunpack.c.h.b16 %v95
    %v290 = vunpack.c.l.b16 %v96
    %v291 = vunpack.c.h.b16 %v96
    %v292 = vunpack.c.l.b16 %v97
    %v293 = vunpack.c.h.b16 %v97
    %v294 = vunpack.c.l.b16 %v98
    %v295 = vunpack.c.h.b16 %v98
    %v296 = vunpack.c.l.b16 %v99
    %v297 = vunpack.c.h.b16 %v99
    %v298 = vunpack.c.l.b16 %v100
    %v299 = vunpack.c.h.b16 %v100
    %v300 = vunpack.c.l.b16 %v101
    %v301 = vunpack.c.h.b16 %v101
    %v302 = vunpack.c.l.b16 %v102
    %v303 = vunpack.c.h.b16 %v102
    %v304 = vunpack.c.l.b16 %v103
    %v305 = vunpack.c.h.b16 %v103
    %v306 = vunpack.c.l.b16 %v104
    %v307 = vunpack.c.h.b16 %v104
    %v308 = vunpack.c.l.b16 %v105
    %v309 = vunpack.c.h.b16 %v105
    %v310 = vunpack.c.l.b16 %v106
    %v311 = vunpack.c.h.b16 %v106
    %v312 = vunpack.c.l.b16 %v107
    %v313 = vunpack.c.h.b16 %v107
    %v314 = vunpack.c.l.b16 %v108
    %v315 = vunpack.c.h.b16 %v108
    %v316 = vunpack.c.l.b16 %v109
    %v317 = vunpack.c.h.b16 %v109
    %v318 = vunpack.c.l.b16 %v110
    %v319 = vunpack.c.h.b16 %v110
    %v320 = vunpack.c.l.b16 %v111
    %v321 = vunpack.c.h.b16 %v111
    %v322 = vunpack.c.l.b16 %v112
    %v323 = vunpack.c.h.b16 %v112
    %v324 = vunpack.c.l.b16 %v113
    %v325 = vunpack.c.h.b16 %v113
    %v326 = vunpack.c.l.b16 %v114
    %v327 = vunpack.c.h.b16 %v114
    %v328 = vunpack.c.l.b16 %v115
    %v329 = vunpack.c.h.b16 %v115
    %v330 = vpack.c.b16 %v206, %v202
    %v331 = vpack.c.b16 %v207, %v203
    %v332 = vpack.c.b16 %v208, %v204
    %v333 = vpack.c.b16 %v209, %v205
    %v334 = vpack.c.b16 %v214, %v210
    %v335 = vpack.c.b16 %v215, %v211
    %v336 = vpack.c.b16 %v216, %v212
    %v337 = vpack.c.b16 %v217, %v213
    %v338 = vpack.c.b16 %v222, %v218
    %v339 = vpack.c.b16 %v223, %v219
    %v340 = vpack.c.b16 %v224, %v220
    %v341 = vpack.c.b16 %v225, %v221
    %v342 = vpack.c.b16 %v230, %v226
    %v343 = vpack.c.b16 %v231, %v227
    %v344 = vpack.c.b16 %v232, %v228
    %v345 = vpack.c.b16 %v233, %v229
    %v346 = vpack.c.b16 %v238, %v234
    %v347 = vpack.c.b16 %v239, %v235
    %v348 = vpack.c.b16 %v240, %v236
    %v349 = vpack.c.b16 %v241, %v237
    %v350 = vpack.c.b16 %v246, %v242
    %v351 = vpack.c.b16 %v247, %v243
    %v352 = vpack.c.b16 %v248, %v244
    %v353 = vpack.c.b16 %v249, %v245
    %v354 = vpack.c.b16 %v254, %v250
    %v355 = vpack.c.b16 %v255, %v251
    %v356 = vpack.c.b16 %v256, %v252
    %v357 = vpack.c.b16 %v257, %v253
    %v358 = vpack.c.b16 %v262, %v258
    %v359 = vpack.c.b16 %v263, %v259
    %v360 = vpack.c.b16 %v264, %v260
    %v361 = vpack.c.b16 %v265, %v261
    %v362 = vpack.c.b16 %v270, %v266
    %v363 = vpack.c.b16 %v271, %v267
    %v364 = vpack.c.b16 %v272, %v268
    %v365 = vpack.c.b16 %v273, %v269
    %v366 = vpack.c.b16 %v278, %v274
    %v367 = vpack.c.b16 %v279, %v275
    %v368 = vpack.c.b16 %v280, %v276
    %v369 = vpack.c.b16 %v281, %v277
    %v370 = vpack.c.b16 %v286, %v282
    %v371 = vpack.c.b16 %v287, %v283
    %v372 = vpack.c.b16 %v288, %v284
    %v373 = vpack.c.b16 %v289, %v285
    %v374 = vpack.c.b16 %v294, %v290
    %v375 = vpack.c.b16 %v295, %v291
    %v376 = vpack.c.b16 %v296, %v292
    %v377 = vpack.c.b16 %v297, %v293
    %v378 = vpack.c.b16 %v302, %v298
    %v379 = vpack.c.b16 %v303, %v299
    %v380 = vpack.c.b16 %v304, %v300
    %v381 = vpack.c.b16 %v305, %v301
    %v382 = vpack.c.b16 %v310, %v306
    %v383 = vpack.c.b16 %v311, %v307
    %v384 = vpack.c.b16 %v312, %v308
    %v385 = vpack.c.b16 %v313, %v309
    %v386 = vpack.c.b16 %v318, %v314
    %v387 = vpack.c.b16 %v319, %v315
    %v388 = vpack.c.b16 %v320, %v316
    %v389 = vpack.c.b16 %v321, %v317
    %v390 = vpack.c.b16 %v326, %v322
    %v391 = vpack.c.b16 %v327, %v323
    %v392 = vpack.c.b16 %v328, %v324
    %v393 = vpack.c.b16 %v329, %v325
    %458 = vmatprep.subr.bf16.mxu0 %v331
    %459 = vmatpush1.bf16.msra.mxu0 %v330
    %460 = vmatprep.subr.bf16.mxu0 %v335
    %461 = vmatpush1.bf16.msra.mxu0 %v334
    %462 = vmatprep.subr.bf16.mxu0 %v339
    %463 = vmatpush1.bf16.msra.mxu0 %v338
    %464 = vmatprep.subr.bf16.mxu0 %v343
    %465 = vmatpush1.bf16.msra.mxu0 %v342
    %466 = vmatprep.subr.bf16.mxu0 %v347
    %467 = vmatpush1.bf16.msra.mxu0 %v346
    %468 = vmatprep.subr.bf16.mxu0 %v351
    %469 = vmatpush1.bf16.msra.mxu0 %v350
    %470 = vmatprep.subr.bf16.mxu0 %v355
    %471 = vmatpush1.bf16.msra.mxu0 %v354
    %472 = vmatprep.subr.bf16.mxu0 %v359
    %473 = vmatpush1.bf16.msra.mxu0 %v358
    %474 = vmatprep.subr.bf16.mxu0 %v363
    %475 = vmatpush1.bf16.msra.mxu0 %v362
    %476 = vmatprep.subr.bf16.mxu0 %v367
    %477 = vmatpush1.bf16.msra.mxu0 %v366
    %478 = vmatprep.subr.bf16.mxu0 %v371
    %479 = vmatpush1.bf16.msra.mxu0 %v370
    %480 = vmatprep.subr.bf16.mxu0 %v375
    %481 = vmatpush1.bf16.msra.mxu0 %v374
    %482 = vmatprep.subr.bf16.mxu0 %v379
    %483 = vmatpush1.bf16.msra.mxu0 %v378
    %484 = vmatprep.subr.bf16.mxu0 %v383
    %485 = vmatpush1.bf16.msra.mxu0 %v382
    %486 = vmatprep.subr.bf16.mxu0 %v387
    %487 = vmatpush1.bf16.msra.mxu0 %v386
    %488 = vmatprep.subr.bf16.mxu0 %v391
    %489 = vmatpush1.bf16.msra.mxu0 %v390
    %490 = vmatprep.mubr.bf16.mxu0 %v51
    %491 = vmatmul.mubr.bf16.gmra.mrb[0].mxu0 %v50
    %v492 = vpop.f32.mrb[0].mxu0
    %v493 = vadd.f32 %v121, %v492
    %v494 = vpop.f32.mrb[0].mxu0
    %v495 = vadd.f32 %v125, %v494
    %v496 = vpop.f32.mrb[0].mxu0
    %v497 = vpop.f32.mrb[0].mxu0
    %498 = vdwg.mxu0
    %499 = vmatprep.subr.bf16.mxu0 %v333
    %500 = vmatpush1.bf16.msra.mxu0 %v332
    %501 = vmatprep.subr.bf16.mxu0 %v337
    %502 = vmatpush1.bf16.msra.mxu0 %v336
    %503 = vmatprep.subr.bf16.mxu0 %v341
    %504 = vmatpush1.bf16.msra.mxu0 %v340
    %505 = vmatprep.subr.bf16.mxu0 %v345
    %506 = vmatpush1.bf16.msra.mxu0 %v344
    %507 = vmatprep.subr.bf16.mxu0 %v349
    %508 = vmatpush1.bf16.msra.mxu0 %v348
    %509 = vmatprep.subr.bf16.mxu0 %v353
    %510 = vmatpush1.bf16.msra.mxu0 %v352
    %511 = vmatprep.subr.bf16.mxu0 %v357
    %512 = vmatpush1.bf16.msra.mxu0 %v356
    %513 = vmatprep.subr.bf16.mxu0 %v361
    %514 = vmatpush1.bf16.msra.mxu0 %v360
    %515 = vmatprep.subr.bf16.mxu0 %v365
    %516 = vmatpush1.bf16.msra.mxu0 %v364
    %517 = vmatprep.subr.bf16.mxu0 %v369
    %518 = vmatpush1.bf16.msra.mxu0 %v368
    %519 = vmatprep.subr.bf16.mxu0 %v373
    %520 = vmatpush1.bf16.msra.mxu0 %v372
    %521 = vmatprep.subr.bf16.mxu0 %v377
    %522 = vmatpush1.bf16.msra.mxu0 %v376
    %523 = vmatprep.subr.bf16.mxu0 %v381
    %524 = vmatpush1.bf16.msra.mxu0 %v380
    %525 = vmatprep.subr.bf16.mxu0 %v385
    %526 = vmatpush1.bf16.msra.mxu0 %v384
    %527 = vmatprep.subr.bf16.mxu0 %v389
    %528 = vmatpush1.bf16.msra.mxu0 %v388
    %529 = vmatprep.subr.bf16.mxu0 %v393
    %530 = vmatpush1.bf16.msra.mxu0 %v392
    %531 = vmatprep.mubr.bf16.mxu0 %v51
    %532 = vmatmul.mubr.bf16.gmra.mrb[0].mxu0 %v50
    %v533 = vpop.f32.mrb[0].mxu0
    %v534 = vadd.f32 %v129, %v533
    %v535 = vpop.f32.mrb[0].mxu0
    %v536 = vadd.f32 %v133, %v535
    %v537 = vpop.f32.mrb[0].mxu0
    %v538 = vpop.f32.mrb[0].mxu0
    %539 = vdwg.mxu0
    %v540 = vxor.u32 %v493, 2147483648
    %v541 = vxor.u32 %v495, 2147483648
    %v542 = vxor.u32 %v534, 2147483648
    %v543 = vxor.u32 %v536, 2147483648
    %v544 = vmul.f32 %v540, 1.442695
    %v545 = vpow.pop %v544
    %v546 = vmul.f32 %v541, 1.442695
    %v547 = vpow.pop %v546
    %v548 = vmul.f32 %v542, 1.442695
    %v549 = vpow.pop %v548
    %v550 = vmul.f32 %v543, 1.442695
    %v551 = vpow.pop %v550
    %v552 = vadd.f32 %v545, 1.0
    %v553 = vadd.f32 %v547, 1.0
    %v554 = vadd.f32 %v549, 1.0
    %v555 = vadd.f32 %v551, 1.0
    %v556 = vrcp.pop %v552
    %v557 = vmul.f32 1.0, %v556
    %v558 = vrcp.pop %v553
    %v559 = vmul.f32 1.0, %v558
    %v560 = vrcp.pop %v554
    %v561 = vmul.f32 1.0, %v560
    %v562 = vrcp.pop %v555
    %v563 = vmul.f32 1.0, %v562
    %v564 = vld [vmem:[%s2] sm:$0x3]
    %v565 = vmul.f32 %v561, %v564
    %v566 = vmul.f32 %v557, %v559
    %v567 = vadd.f32 %v565, %v566
    %568 = vst [vmem:[#allocation8] sm:$0x3] %v567
    %v569 = vtanh.pop %v567
    %v570 = vmul.f32 %v563, %v569
    %v571 = vpack.c.bf16 %v570, %v570
    %572 = vst [vmem:[#allocation7] sm:$0x1] %v571
    // Predicated region
    $region30: #{tpu_custom_call.1} parent=1 // pred_check
      _
    $region31: #{tpu_custom_call.1} parent=1 // pred_check_branch
      %574 = sbr.rel (0) target = $region33
    $region32: #{tpu_custom_call.1} parent=1 // pred_region
      %s576 = ssub.s32 16, 16
      %577 = vsyncadd [#allocation4], %s576
      %s579 = sshll.u32 [#allocation7], 4
      %s580 = int_to_ptr.vmem [resolvable:$true] %s579
      %582 = dma.vmem_to_hbm [thread:$0]  %s580, 16, %s5, [#allocation4]
    $region33: #{tpu_custom_call.1} parent=1 // pred_fallthru
      _
    // Predicated region
    $region34: #{tpu_custom_call.1} parent=1 // pred_check
      _
    $region35: #{tpu_custom_call.1} parent=1 // pred_check_branch
      %584 = sbr.rel (0) target = $region37
    $region36: #{tpu_custom_call.1} parent=1 // pred_region
      %s586 = ssub.s32 32, 32
      %587 = vsyncadd [#allocation9], %s586
      %s589 = sshll.u32 [#allocation8], 4
      %s590 = int_to_ptr.vmem [resolvable:$true] %s589
      %592 = dma.vmem_to_hbm [thread:$0]  %s590, 32, %s6, [#allocation9]
    $region37: #{tpu_custom_call.1} parent=1 // pred_fallthru
      _
    // Predicated region
    $region38: #{tpu_custom_call.1} parent=1 // pred_check
      _
    $region39: #{tpu_custom_call.1} parent=1 // pred_check_branch
      %594 = sbr.rel (0) target = $region41
    $region40: #{tpu_custom_call.1} parent=1 // pred_region
      %595 = dma.done [#allocation4], 16
    $region41: #{tpu_custom_call.1} parent=1 // pred_fallthru
      _
    // Predicated region
    $region42: #{tpu_custom_call.1} parent=1 // pred_check
      _
    $region43: #{tpu_custom_call.1} parent=1 // pred_check_branch
      %597 = sbr.rel (0) target = $region45
    $region44: #{tpu_custom_call.1} parent=1 // pred_region
      %598 = dma.done [#allocation9], 32
    $region45: #{tpu_custom_call.1} parent=1 // pred_fallthru
      _
    %599 = vsyncpa [#allocation3], 1
    %600 = vsyncpa [#allocation6], 1
    %601 = vsyncpa [#allocation4], 1
    %602 = vsyncpa [#allocation9], 1

</llo_original>
